<compile_context>
chip_gen: v7x
topology: tpu7x:2x2x1
jax: 0.10.0
libtpu: 0.0.40
codegen_flags: <defaults>
</compile_context>

<pallas_src>
from functools import partial

import jax
import jax.numpy as jnp
from jax import lax
from jax.experimental import pallas as pl
from jax.experimental.pallas import tpu as pltpu

EPS = 1e-5
VMEM_LIMIT_BYTES = 48 * 1024 * 1024   # explicit; keeps headroom on v7x's 64 MiB VMEM
TM_VMEM_BUDGET = 36 * 1024 * 1024     # budget used when deriving the M tile


def _round_up(x, m):
    return (x + m - 1) // m * m


def _pick_tm(requested, hw, cin, c4, in_bytes, out_bytes):
    """Largest lane-dense M tile that fits the VMEM budget (double-buffered x/out tiles
    + single-buffered constants)."""
    const = cin * c4 * in_bytes + c4 * 4
    per_col = 2 * cin * in_bytes + 2 * c4 * out_bytes
    cap = max((TM_VMEM_BUDGET - const) // max(per_col, 1), 128)
    tm = min(int(requested), _round_up(hw, 128), int(cap))
    if tm >= 256:
        tm = tm // 256 * 256          # multiple of 256: matches v6e/v7x 256-wide MXU
    else:
        tm = max(128, tm // 128 * 128)
    return int(tm)


def _const_spec(shape, index_map):
    """BlockSpec for operands with a constant index_map: request single buffering to save
    VMEM (most valuable on v7x); fall back gracefully if the API kwarg is unavailable."""
    try:
        return pl.BlockSpec(shape, index_map, pipeline_mode=pl.Buffered(1))
    except (TypeError, AttributeError):
        return pl.BlockSpec(shape, index_map)


# ---------------------------------------------------------------------------
# Pass 1: tiled reduction of sum(X) (Cin,1) and X X^T (Cin,Cin) in f32.
# Output blocks are resident accumulators across the (arbitrary, arbitrary) grid.
# ---------------------------------------------------------------------------
def _stats_kernel(x_ref, sumx_ref, xtx_ref):
    x = x_ref[0]                                                     # (Cin, tm), lanes = M
    psum = jnp.sum(x.astype(jnp.float32), axis=1, keepdims=True)     # (Cin, 1)
    pxtx = lax.dot_general(x, x, (((1,), (1,)), ((), ())),           # (Cin, Cin), f32 acc
                           preferred_element_type=jnp.float32)
    first = jnp.logical_and(pl.program_id(0) == 0, pl.program_id(1) == 0)

    @pl.when(first)
    def _():
        sumx_ref[...] = psum
        xtx_ref[...] = pxtx

    @pl.when(jnp.logical_not(first))
    def _():
        sumx_ref[...] = sumx_ref[...] + psum
        xtx_ref[...] = xtx_ref[...] + pxtx


# ---------------------------------------------------------------------------
# Pass 2: out^T = relu(W_scaled @ X^T + shift).  BN scale is pre-folded into W rows,
# shift is a (4*Cout, 1) broadcast add.  Lane-dense (C4, tm) output, fully parallel grid.
# ---------------------------------------------------------------------------
def _deconv_bn_relu_kernel(x_ref, w_ref, shift_ref, o_ref, *, use_fma):
    x = x_ref[0]                       # (Cin, tm)
    w = w_ref[...]                     # (C4, Cin), BN scale already folded in
    if use_fma:
        # Tiny Cin: skip the MXU, do the contraction as Cin VPU broadcast-FMAs.
        xf = x.astype(jnp.float32)
        wf = w.astype(jnp.float32)
        y = wf[:, 0:1] * xf[0:1, :]
        for ic in range(1, x.shape[0]):
            y = y + wf[:, ic:ic + 1] * xf[ic:ic + 1, :]
    else:
        y = jnp.dot(w, x, preferred_element_type=jnp.float32)
    o_ref[0] = jnp.maximum(y + shift_ref[...], 0.0).astype(o_ref.dtype)


def deconv_block(x_nchw, weight, bias, gamma, beta, *,
                 tile_m=2048, compute_dtype=jnp.bfloat16):
    """DeconvBlock forward.  x_nchw: (N, Cin, H, W) -> (N, Cout, 2H, 2W)."""
    del bias  # exact: per-output-channel constant cancels in the BN mean subtraction
    N, Cin, H, W = x_nchw.shape
    Cout = weight.shape[1]
    HW = H * W
    C4 = 4 * Cout
    out_dtype = x_nchw.dtype

    in_bytes = jnp.dtype(compute_dtype).itemsize
    out_bytes = jnp.dtype(out_dtype).itemsize
    tm = _pick_tm(tile_m, HW, Cin, C4, in_bytes, out_bytes)
    HW_pad = _round_up(HW, tm)
    n_tiles = HW_pad // tm
    use_fma = Cin <= 16

    # X^T per image: pure reshape of NCHW (no transpose, no extra HBM round trip).
    x3 = x_nchw.reshape(N, Cin, HW).astype(compute_dtype)
    if HW_pad != HW:
        x3 = jnp.pad(x3, ((0, 0), (0, 0), (0, HW_pad - HW)))   # zero cols: no effect on stats

    # ConvTranspose2d weight (Cin, Cout, 2, 2) -> W_all^T (4*Cout, Cin),
    # row = (kh*2 + kw)*Cout + oc.
    wt_f32 = jnp.transpose(weight, (2, 3, 1, 0)).reshape(C4, Cin).astype(jnp.float32)

    # ---- Pass 1: sufficient statistics of X (tiled, pipelined f32 reduction) ----
    stats_cost = pl.CostEstimate(
        flops=int(N * HW * Cin * (2 * Cin + 2)), transcendentals=0,
        bytes_accessed=int(N * HW_pad * Cin * in_bytes + (Cin + Cin * Cin) * 4))
    sum_x, xtx = pl.pallas_call(
        _stats_kernel,
        out_shape=(jax.ShapeDtypeStruct((Cin, 1), jnp.float32),
                   jax.ShapeDtypeStruct((Cin, Cin), jnp.float32)),
        grid=(N, n_tiles),
        in_specs=[pl.BlockSpec((1, Cin, tm), lambda n, i: (n, 0, i))],
        out_specs=(pl.BlockSpec((Cin, 1), lambda n, i: (0, 0)),
                   pl.BlockSpec((Cin, Cin), lambda n, i: (0, 0))),
        compiler_params=pltpu.CompilerParams(
            dimension_semantics=("arbitrary", "arbitrary"),
            vmem_limit_bytes=VMEM_LIMIT_BYTES),
        cost_estimate=stats_cost,
    )(x3)
    # TODO(synk): on v7x split this reduction across the two TensorCores (CORE_PARALLEL
    # leading axis with per-core partial sums) -- ~2x on pass 1 there, no-op on v5e/v6e.

    # ---- Tiny per-channel BN math (plain JAX, f32) ----
    # sum_m y_row = W^T_row . sum(X) ;  sum_m y_row^2 = W^T_row (X X^T) W^T_row
    cnt = 4.0 * N * H * W
    sum_y_rows = (wt_f32 @ sum_x)[:, 0]                       # (C4,)
    sum_y2_rows = jnp.sum((wt_f32 @ xtx) * wt_f32, axis=1)    # (C4,)
    sum_y = sum_y_rows.reshape(4, Cout).sum(axis=0)           # fold the 4 taps
    sum_y2 = sum_y2_rows.reshape(4, Cout).sum(axis=0)
    mean = sum_y / cnt
    var = jnp.maximum(sum_y2 / cnt - mean * mean, 0.0)        # biased, as PyTorch BN uses
    inv = lax.rsqrt(var + EPS)
    scale_c = gamma.astype(jnp.float32) * inv
    shift_c = beta.astype(jnp.float32) - mean * scale_c
    scale_c4 = jnp.tile(scale_c, 4).reshape(C4, 1)            # row layout p*Cout + oc
    shift = jnp.tile(shift_c, 4).reshape(C4, 1)
    # Fold the BN scale into the (tiny) weight rows: kernel becomes matmul + add + relu.
    w_scaled = (wt_f32 * scale_c4).astype(compute_dtype)

    # ---- Pass 2: streamed matmul + shift + ReLU, lane-dense along M, parallel grid ----
    main_cost = pl.CostEstimate(
        flops=int(2 * N * HW * Cin * C4 + 2 * N * HW * C4), transcendentals=0,
        bytes_accessed=int(N * HW_pad * Cin * in_bytes + C4 * Cin * in_bytes + C4 * 4
                           + N * HW_pad * C4 * out_bytes))
    out = pl.pallas_call(
        partial(_deconv_bn_relu_kernel, use_fma=use_fma),
        out_shape=jax.ShapeDtypeStruct((N, C4, HW_pad), out_dtype),
        grid=(N, n_tiles),
        in_specs=[pl.BlockSpec((1, Cin, tm), lambda n, i: (n, 0, i)),
                  _const_spec((C4, Cin), lambda n, i: (0, 0)),
                  _const_spec((C4, 1), lambda n, i: (0, 0))],
        out_specs=pl.BlockSpec((1, C4, tm), lambda n, i: (n, 0, i)),
        compiler_params=pltpu.CompilerParams(
            dimension_semantics=("parallel", "parallel"),
            vmem_limit_bytes=VMEM_LIMIT_BYTES),
        cost_estimate=main_cost,
    )(x3, w_scaled, shift)
    # TODO(synk): for large Cin (real decoder widths) add a K (Cin) grid axis with a VMEM
    # f32 accumulator (and tile C4) instead of shrinking tm under v7x's 64 MiB VMEM.

    # Layout glue: scatter the 4 taps back into NCHW (N, Cout, 2H, 2W).
    # TODO(synk): fold this (kh,kw) de-interleave into the kernel's output layout (needs
    # NHWC model-wide activations or an in-kernel sublane/lane interleave); left as a
    # wrapper transpose for lowering safety.
    y = out if HW_pad == HW else out[:, :, :HW]
    y = y.reshape(N, 2, 2, Cout, H, W)             # [n, kh, kw, oc, h, w]
    y = jnp.transpose(y, (0, 3, 4, 1, 5, 2))       # [n, oc, h, kh, w, kw]
    return y.reshape(N, Cout, 2 * H, 2 * W)


def reference(x, weight, bias, gamma, beta):
    """Pure-JAX reference of PyTorch DeconvBlock forward (training-mode BN, with bias)."""
    N, Cin, H, W = x.shape
    Cout = weight.shape[1]
    # out[n, oc, 2h+kh, 2w+kw] = b[oc] + sum_ic x[n,ic,h,w] * W[ic,oc,kh,kw]
    y = jnp.einsum('nchw,codk->nohdwk', x, weight) + bias[None, :, None, None, None, None]
    y = y.reshape(N, Cout, 2 * H, 2 * W)
    mean = y.mean(axis=(0, 2, 3), keepdims=True)
    var = y.var(axis=(0, 2, 3), keepdims=True)      # biased, as PyTorch BN normalization
    yn = (y - mean) / jnp.sqrt(var + EPS) * gamma[None, :, None, None] + beta[None, :, None, None]
    return jnp.maximum(yn, 0.0)


if __name__ == "__main__":
    key = jax.random.PRNGKey(0)
    k1, k2, k3, k4, k5 = jax.random.split(key, 5)

    N, Cin, Cout, H, W = 2, 4, 8, 16, 16
    x = jax.random.normal(k1, (N, Cin, H, W), jnp.float32)
    # Parameter shapes per nn.ConvTranspose2d / nn.BatchNorm2d.
    weight = 0.25 * jax.random.normal(k2, (Cin, Cout, 2, 2), jnp.float32)   # (in, out, kH, kW)
    bias = 0.1 * jax.random.normal(k3, (Cout,), jnp.float32)
    gamma = 1.0 + 0.1 * jax.random.normal(k4, (Cout,), jnp.float32)
    beta = 0.1 * jax.random.normal(k5, (Cout,), jnp.float32)

    ref = reference(x, weight, bias, gamma, beta)

    # f32 compute path: exact check against the reference.
    out_f32 = jax.block_until_ready(
        deconv_block(x, weight, bias, gamma, beta, compute_dtype=jnp.float32))
    assert out_f32.shape == (N, Cout, 2 * H, 2 * W)
    assert jnp.allclose(out_f32, ref, atol=1e-4, rtol=1e-4), "f32 mismatch vs reference"

    # bf16 compute path (default, MXU-native on v6e/v7x): loose check.
    out_bf16 = jax.block_until_ready(
        deconv_block(x, weight, bias, gamma, beta, compute_dtype=jnp.bfloat16))
    assert out_bf16.shape == (N, Cout, 2 * H, 2 * W)
    assert jnp.allclose(out_bf16, ref, atol=6e-2, rtol=6e-2), "bf16 mismatch vs reference"

    print("KERNEL_OK")
</pallas_src>

<mosaic_0001>
module attributes {stable_mosaic.version = 11 : i64} {
  func.func @_stats_kernel(%arg0: i32, %arg1: i32, %arg2: memref<1x4x256xf32, #tpu.memory_space<vmem>>, %arg3: memref<4x1xf32, #tpu.memory_space<vmem>>, %arg4: memref<4x4xf32, #tpu.memory_space<vmem>>) attributes {dimension_semantics = [#tpu.dimension_semantics<arbitrary>, #tpu.dimension_semantics<arbitrary>], iteration_bounds = array<i64: 2, 1>, scalar_prefetch = 0 : i64, scratch_operands = 0 : i64, tpu.core_type = #tpu.core_type<tc>, window_params = [{transform_indices = @transform_0, window_bounds = array<i64: 1, 4, 256>}, {pipeline_mode = #tpu.pipeline_mode<synchronous>, transform_indices = @transform_1, window_bounds = array<i64: 4, 1>}, {pipeline_mode = #tpu.pipeline_mode<synchronous>, transform_indices = @transform_2, window_bounds = array<i64: 4, 4>}]} {
    %c0 = arith.constant 0 : index
    %c0_0 = arith.constant 0 : index
    %c0_1 = arith.constant 0 : index
    %0 = vector.load %arg2[%c0, %c0_0, %c0_1] : memref<1x4x256xf32, #tpu.memory_space<vmem>>, vector<1x4x256xf32>
    %1 = vector.shape_cast %0 : vector<1x4x256xf32> to vector<4x256xf32>
    %cst = arith.constant dense<0.000000e+00> : vector<4xf32>
    %2 = vector.multi_reduction <add>, %1, %cst [1] : vector<4x256xf32> to vector<4xf32>
    %3 = vector.shape_cast %2 : vector<4xf32> to vector<4x1xf32>
    %cst_2 = arith.constant dense<0.000000e+00> : vector<4x4xf32>
    %4 = tpu.matmul %1, %1, %cst_2 {dimension_numbers = #tpu.dot_dimension_numbers<[1], [1], [0], [0], [0, 0, 1, 0], [], []>} : vector<4x256xf32>, vector<4x256xf32>, vector<4x4xf32> -> vector<4x4xf32>
    %c0_i32 = arith.constant 0 : i32
    %5 = arith.cmpi eq, %arg0, %c0_i32 : i32
    %c0_i32_3 = arith.constant 0 : i32
    %6 = arith.cmpi eq, %arg1, %c0_i32_3 : i32
    %7 = arith.andi %5, %6 : i1
    %8 = arith.extui %7 : i1 to i32
    %c0_i32_4 = arith.constant 0 : i32
    %9 = arith.cmpi ne, %8, %c0_i32_4 : i32
    scf.if %9 {
      %c0_6 = arith.constant 0 : index
      %c0_7 = arith.constant 0 : index
      %13 = vector.load %arg3[%c0_6, %c0_7] : memref<4x1xf32, #tpu.memory_space<vmem>>, vector<4x1xf32>
      tpu.vector_store %arg3[%c0_6, %c0_7], %3 {strides = array<i32>} : memref<4x1xf32, #tpu.memory_space<vmem>>, vector<4x1xf32>,
      %c0_8 = arith.constant 0 : index
      %c0_9 = arith.constant 0 : index
      %14 = vector.load %arg4[%c0_8, %c0_9] : memref<4x4xf32, #tpu.memory_space<vmem>>, vector<4x4xf32>
      tpu.vector_store %arg4[%c0_8, %c0_9], %4 {strides = array<i32>} : memref<4x4xf32, #tpu.memory_space<vmem>>, vector<4x4xf32>,
    } else {
    }
    %true = arith.constant true
    %10 = arith.xori %7, %true : i1
    %11 = arith.extui %10 : i1 to i32
    %c0_i32_5 = arith.constant 0 : i32
    %12 = arith.cmpi ne, %11, %c0_i32_5 : i32
    scf.if %12 {
      %c0_6 = arith.constant 0 : index
      %c0_7 = arith.constant 0 : index
      %13 = vector.load %arg3[%c0_6, %c0_7] : memref<4x1xf32, #tpu.memory_space<vmem>>, vector<4x1xf32>
      %14 = arith.addf %13, %3 : vector<4x1xf32>
      %c0_8 = arith.constant 0 : index
      %c0_9 = arith.constant 0 : index
      %15 = vector.load %arg3[%c0_8, %c0_9] : memref<4x1xf32, #tpu.memory_space<vmem>>, vector<4x1xf32>
      tpu.vector_store %arg3[%c0_8, %c0_9], %14 {strides = array<i32>} : memref<4x1xf32, #tpu.memory_space<vmem>>, vector<4x1xf32>,
      %c0_10 = arith.constant 0 : index
      %c0_11 = arith.constant 0 : index
      %16 = vector.load %arg4[%c0_10, %c0_11] : memref<4x4xf32, #tpu.memory_space<vmem>>, vector<4x4xf32>
      %17 = arith.addf %16, %4 : vector<4x4xf32>
      %c0_12 = arith.constant 0 : index
      %c0_13 = arith.constant 0 : index
      %18 = vector.load %arg4[%c0_12, %c0_13] : memref<4x4xf32, #tpu.memory_space<vmem>>, vector<4x4xf32>
      tpu.vector_store %arg4[%c0_12, %c0_13], %17 {strides = array<i32>} : memref<4x4xf32, #tpu.memory_space<vmem>>, vector<4x4xf32>,
    } else {
    }
    return
  }
  func.func @transform_0(%arg0: i32, %arg1: i32) -> (i32, i32, i32) {
    %c0_i32 = arith.constant 0 : i32
    %c0_i32_0 = arith.constant 0 : i32
    return %arg0, %c0_i32, %arg1 : i32, i32, i32
  }
  func.func @transform_1(%arg0: i32, %arg1: i32) -> (i32, i32) {
    %c0_i32 = arith.constant 0 : i32
    %c0_i32_0 = arith.constant 0 : i32
    %c0_i32_1 = arith.constant 0 : i32
    return %c0_i32, %c0_i32_0 : i32, i32
  }
  func.func @transform_2(%arg0: i32, %arg1: i32) -> (i32, i32) {
    %c0_i32 = arith.constant 0 : i32
    %c0_i32_0 = arith.constant 0 : i32
    %c0_i32_1 = arith.constant 0 : i32
    return %c0_i32, %c0_i32_0 : i32, i32
  }
}

</mosaic_0001>

<llo_original>
// kernel: tpu_custom_call.1
$region0: #{tpu_custom_call.1}
  #allocation0 [shape = 'u32[]', space=smem, size = 0x4, offset = 0x4, fixed_abs, tag = 'smem constant byte address 0x4 - core index']
  #allocation1 [shape = 'u32[144,128]{1,0:T(1,128)}', space=vmem, size = 0x12000, scoped, tag = 'internal scratch']
  %s0 = inlined_call_operand.hbm [shape: f32[2,4,256], index: 0, kind: input, shape index: {}]
  %s1 = inlined_call_operand.vmem [shape: f32[4,1], index: 1, kind: output, shape index: {0}]
  %s2 = inlined_call_operand.hbm [shape: f32[4,4], index: 2, kind: output, shape index: {1}]
  %3 = xla_tuple %s1, %s2
  %s4 = sld [smem:[#allocation0]]
  $region57: #{tpu_custom_call.1} parent=0
    _
  %s6 = ssub.s32 1, %s4
  %s7 = scalar_select 0, %s6, %s4
  $region1: #{tpu_custom_call.1} parent=0
    #allocation2 [shape = 'u8[8192]{0}', space=vmem, size = 0x2000, scoped, tag = 'input window, operand 0']
    #allocation3 [shape = 's32[2]{0}', space=sflag, size = 0x8, scoped, tag = 'scoped memory for tpu_custom_call.1']
    #allocation4 [shape = 's32[2]{0}', space=sflag, size = 0x8, scoped, tag = 'scoped memory for tpu_custom_call.1']
    #allocation5 [shape = 'u8[2048]{0}', space=vmem, size = 0x800, scoped, tag = 'output window, operand 1, single buffered']
    %8 = vsyncpa [#allocation3], 0
    %s9 = scalar_lea.sflag [#allocation3], 1
    %10 = vsyncpa %s9, 0
    %11 = vsyncpa [#allocation4], 0
    loop: start=0, step=1, limit=4
    $region2: #{tpu_custom_call.1} parent=1 // loop_pre_header
      _
    $region3: #{tpu_custom_call.1} parent=1 // loop_header
      %s13 = sphi 0, %s17
      %p14 = scmp.ge.s32.totalorder %s13, 4
      %s20 = sphi 0, %s32
      %s21 = sphi 0, %s28
      %s22 = sphi 0, %s20
      %s23 = sphi 0, %s21
      %s24 = sphi 0, %s22
      %s25 = sphi 0, %s23
      %s37 = sphi 0, %s39
      %s40 = sphi 0, %s37
      %s41 = sphi 0, %s40
      %s57 = sphi 0, %s41
      %s61 = sphi 0, %s61
      %s63 = sphi 0, %s61
      %s64 = sphi 0, %s63
      %s78 = sphi 0, %s64
      %s82 = sphi 0, %s82
      %s84 = sphi 0, %s82
      %s85 = sphi 0, %s84
      %s99 = sphi 0, %s85
    $region4: #{tpu_custom_call.1} parent=1 // loop_header_branch
      %16 = sbr.rel (%p14) target = $region8
    $region5: #{tpu_custom_call.1} parent=1 // loop_body
      %s18 = ssub.s32 %s13, 1
      %s19 = ssub.s32 %s13, 2
      %s26 = sadd.s32 1, %s21
      %p27 = scmp.ge.s32.totalorder %s26, 1
      %s28 = scalar_select %p27, 0, %s26
      %s29 = sadd.s32 1, %s20
      %s30 = scalar_select %p27, %s29, %s20
      %p31 = scmp.ge.s32.totalorder %s30, 2
      %s32 = scalar_select %p31, 0, %s30
      %s33 = ssub.s32 %s20, %s32
      %s34 = ssub.s32 %s21, %s28
      %s35 = sor.u32 %s33, %s34
      %p36 = scmp.eq.s32.totalorder %s35, 0
      %s38 = sadd.s32 %s37, 1
      %s39 = scalar_select %p36, %s37, %s38
      %p42 = pneg %p36
      %p43 = scmp.eq.s32.totalorder %s13, 1
      %p44 = por %p42, %p43
      %p45 = scmp.ne.s32.totalorder %s37, %s40
      %p46 = scmp.eq.s32.totalorder %s13, 0
      %p47 = por %p45, %p46
      %p48 = scmp.ne.s32.totalorder %s37, %s40
      %p49 = scmp.eq.s32.totalorder %s18, 1
      %p50 = por %p48, %p49
      %p51 = scmp.ne.s32.totalorder %s40, %s41
      %p52 = scmp.eq.s32.totalorder %s18, 0
      %p53 = por %p51, %p52
      %p54 = scmp.ne.s32.totalorder %s40, %s41
      %p55 = scmp.eq.s32.totalorder %s19, 1
      %p56 = por %p54, %p55
      %p58 = scmp.ne.s32.totalorder %s41, %s57
      %p59 = scmp.eq.s32.totalorder %s19, 0
      %p60 = por %p58, %p59
      %s62 = sadd.s32 %s61, 1
      %p65 = scmp.eq.s32.totalorder %s13, 1
      %p66 = scmp.ne.s32.totalorder %s61, %s63
      %p67 = scmp.eq.s32.totalorder %s13, 0
      %p68 = por %p66, %p67
      %p69 = scmp.ne.s32.totalorder %s61, %s63
      %p70 = scmp.eq.s32.totalorder %s18, 1
      %p71 = por %p69, %p70
      %p72 = scmp.ne.s32.totalorder %s63, %s64
      %p73 = scmp.eq.s32.totalorder %s18, 0
      %p74 = por %p72, %p73
      %p75 = scmp.ne.s32.totalorder %s63, %s64
      %p76 = scmp.eq.s32.totalorder %s19, 1
      %p77 = por %p75, %p76
      %p79 = scmp.ne.s32.totalorder %s64, %s78
      %p80 = scmp.eq.s32.totalorder %s19, 0
      %p81 = por %p79, %p80
      %s83 = sadd.s32 %s82, 1
      %p86 = scmp.eq.s32.totalorder %s13, 1
      %p87 = scmp.ne.s32.totalorder %s82, %s84
      %p88 = scmp.eq.s32.totalorder %s13, 0
      %p89 = por %p87, %p88
      %p90 = scmp.ne.s32.totalorder %s82, %s84
      %p91 = scmp.eq.s32.totalorder %s18, 1
      %p92 = por %p90, %p91
      %p93 = scmp.ne.s32.totalorder %s84, %s85
      %p94 = scmp.eq.s32.totalorder %s18, 0
      %p95 = por %p93, %p94
      %p96 = scmp.ne.s32.totalorder %s84, %s85
      %p97 = scmp.eq.s32.totalorder %s19, 1
      %p98 = por %p96, %p97
      %p100 = scmp.ne.s32.totalorder %s85, %s99
      %p101 = scmp.eq.s32.totalorder %s19, 0
      %p102 = por %p100, %p101
      %p103 = scmp.le.s32.totalorder 1, %s13
      %p104 = scmp.lt.s32.totalorder %s13, 3
      %p105 = pnand %p103, %p104
      %p106 = pneg %p105
      // Predicated region
      $region9: #{tpu_custom_call.1} parent=5 // pred_check
        _
      $region10: #{tpu_custom_call.1} parent=5 // pred_check_branch
        %108 = sbr.rel (%p105) target = $region12
      $region11: #{tpu_custom_call.1} parent=5 // pred_region
        %s109 = ssub.s32 %s13, 1
      $region12: #{tpu_custom_call.1} parent=5 // pred_fallthru
        _
      %p110 = scmp.lt.s32.totalorder %s13, 2
      // Predicated region
      $region13: #{tpu_custom_call.1} parent=5 // pred_check
        %p111 = pneg %p110
      $region14: #{tpu_custom_call.1} parent=5 // pred_check_branch
        %113 = sbr.rel (%p111) target = $region16
      $region15: #{tpu_custom_call.1} parent=5 // pred_region
        // Predicated region
        $region17: #{tpu_custom_call.1} parent=15 // pred_check
          %p114 = pneg %p47
        $region18: #{tpu_custom_call.1} parent=15 // pred_check_branch
          %116 = sbr.rel (%p114) target = $region20
        $region19: #{tpu_custom_call.1} parent=15 // pred_region
          %s117 = sand.u32 %s37, 1
          %s118 = scalar_lea.sflag [#allocation3], %s117
          %s119 = sand.u32 %s37, 1
          %s120 = smul.addr %s119, 8
          %s121 = scalar_lea.vmem [#allocation2], %s120
          %s122 = smul.u32 2, %s21
          %s124 = ssub.s32 128, 128
          %125 = vsyncadd %s118, %s124
          %s126 = smul.addr %s20, 2
          %s127 = sadd.s32 %s122, %s126
          %s128 = smul.addr %s127, 64
          %s129 = scalar_lea.hbm %s0, %s128
          %s131 = sshll.u32 %s121, 4
          %s132 = int_to_ptr.vmem [resolvable:$true] %s131
          %134 = dma.hbm_to_vmem [thread:$0]  %s129, 128, %s132, %s118
        $region20: #{tpu_custom_call.1} parent=15 // pred_fallthru
          _
      $region16: #{tpu_custom_call.1} parent=5 // pred_fallthru
        _
      %p135 = scmp.le.s32.totalorder 1, %s13
      %p136 = scmp.lt.s32.totalorder %s13, 3
      %p137 = pnand %p135, %p136
      %p138 = pneg %p137
      // Predicated region
      $region21: #{tpu_custom_call.1} parent=5 // pred_check
        _
      $region22: #{tpu_custom_call.1} parent=5 // pred_check_branch
        %140 = sbr.rel (%p137) target = $region24
      $region23: #{tpu_custom_call.1} parent=5 // pred_region
        %s141 = ssub.s32 %s13, 1
        %s142 = sand.u32 %s40, 1
        %s143 = scalar_lea.sflag [#allocation3], %s142
        %s144 = sand.u32 %s40, 1
        %s145 = smul.addr %s144, 8
        %s146 = scalar_lea.vmem [#allocation2], %s145
        // Predicated region
        $region25: #{tpu_custom_call.1} parent=23 // pred_check
          %p147 = pneg %p53
        $region26: #{tpu_custom_call.1} parent=23 // pred_check_branch
          %149 = sbr.rel (%p147) target = $region28
        $region27: #{tpu_custom_call.1} parent=23 // pred_region
          %150 = dma.done %s143, 128
        $region28: #{tpu_custom_call.1} parent=23 // pred_fallthru
          _
        %s151 = sand.u32 %s40, 1
        %s152 = scalar_lea.sflag [#allocation3], %s151
        %s153 = sand.u32 %s40, 1
        %s154 = smul.addr %s153, 8
        %s155 = scalar_lea.vmem [#allocation2], %s154
        %p156 = pneg %p53
        %p157 = pneg %p50
        %p158 = pneg %p74
        %p159 = pneg %p71
        %p160 = pneg %p95
        %p161 = pneg %p92
        %s162 = smul.u32 2, %s23
        %v163 = vld [vmem:[%s146] sm:$0xff]
        %v165 = vcombine.high %v163, %v163
        %vm167 = vcmask 1043456
        %v168 = vsel %vm167, %v163, 0.0
        %v169 = vsel %vm167, %v165, 0.0
        %v170 = vadd.f32 %v168, %v169
        %171 = vadd.xlane.f32.xlu0 %v170
        %v172 = vpop.xlane.xlu0 %171
        %173 = vmatprep.subr.mxu0 %v165
        %174 = vmatpush1.xpose.msra.mxu0 %v163
        %175 = vmatprep.subr.mxu0 0.0
        %176 = vmatpush1.xpose.msra.mxu0 0.0
        %177 = vmatprep.subr.mxu0 0.0
        %178 = vmatpush1.xpose.msra.mxu0 0.0
        %179 = vmatprep.subr.mxu0 0.0
        %180 = vmatpush1.xpose.msra.mxu0 0.0
        %181 = vmatprep.subr.mxu0 0.0
        %182 = vmatpush1.xpose.msra.mxu0 0.0
        %183 = vmatprep.subr.mxu0 0.0
        %184 = vmatpush1.xpose.msra.mxu0 0.0
        %185 = vmatprep.subr.mxu0 0.0
        %186 = vmatpush1.xpose.msra.mxu0 0.0
        %187 = vmatprep.subr.mxu0 0.0
        %188 = vmatpush1.xpose.msra.mxu0 0.0
        %189 = vmatprep.subr.mxu0 0.0
        %190 = vmatpush1.xpose.msra.mxu0 0.0
        %191 = vmatprep.subr.mxu0 0.0
        %192 = vmatpush1.xpose.msra.mxu0 0.0
        %193 = vmatprep.subr.mxu0 0.0
        %194 = vmatpush1.xpose.msra.mxu0 0.0
        %195 = vmatprep.subr.mxu0 0.0
        %196 = vmatpush1.xpose.msra.mxu0 0.0
        %197 = vmatprep.subr.mxu0 0.0
        %198 = vmatpush1.xpose.msra.mxu0 0.0
        %199 = vmatprep.subr.mxu0 0.0
        %200 = vmatpush1.xpose.msra.mxu0 0.0
        %201 = vmatprep.subr.mxu0 0.0
        %202 = vmatpush1.xpose.msra.mxu0 0.0
        %203 = vmatprep.subr.mxu0 0.0
        %204 = vmatpush1.xpose.msra.mxu0 0.0
        %205 = vmatprep.subr.mxu0 0.0
        %206 = vmatpush1.xpose.msra.mxu0 0.0
        %207 = vmatprep.subr.mxu0 0.0
        %208 = vmatpush1.xpose.msra.mxu0 0.0
        %209 = vmatprep.subr.mxu0 0.0
        %210 = vmatpush1.xpose.msra.mxu0 0.0
        %211 = vmatprep.subr.mxu0 0.0
        %212 = vmatpush1.xpose.msra.mxu0 0.0
        %213 = vmatprep.subr.mxu0 0.0
        %214 = vmatpush1.xpose.msra.mxu0 0.0
        %215 = vmatprep.subr.mxu0 0.0
        %216 = vmatpush1.xpose.msra.mxu0 0.0
        %217 = vmatprep.subr.mxu0 0.0
        %218 = vmatpush1.xpose.msra.mxu0 0.0
        %219 = vmatprep.subr.mxu0 0.0
        %220 = vmatpush1.xpose.msra.mxu0 0.0
        %221 = vmatprep.subr.mxu0 0.0
        %222 = vmatpush1.xpose.msra.mxu0 0.0
        %223 = vmatprep.subr.mxu0 0.0
        %224 = vmatpush1.xpose.msra.mxu0 0.0
        %225 = vmatprep.subr.mxu0 0.0
        %226 = vmatpush1.xpose.msra.mxu0 0.0
        %227 = vmatprep.subr.mxu0 0.0
        %228 = vmatpush1.xpose.msra.mxu0 0.0
        %229 = vmatprep.subr.mxu0 0.0
        %230 = vmatpush1.xpose.msra.mxu0 0.0
        %231 = vmatprep.subr.mxu0 0.0
        %232 = vmatpush1.xpose.msra.mxu0 0.0
        %233 = vmatprep.subr.mxu0 0.0
        %234 = vmatpush1.xpose.msra.mxu0 0.0
        %235 = vmatprep.subr.mxu0 0.0
        %236 = vmatpush1.xpose.msra.mxu0 0.0
        %237 = vmatprep.mubr.f32.mxu0 %v165
        %238 = vmatmul.mubr.f32.gmra.mrb[0].mxu0 %v163
        %v239 = vpop.f32.mrb[0].mxu0
        %v240 = vadd.f32 0.0, %v239
        %v241 = vpop.f32.mrb[0].mxu0
        %242 = vdwg.mxu0
        %p243 = scmp.eq.s32.totalorder %s22, 0
        %p244 = scmp.eq.s32.totalorder %s23, 0
        %p245 = pnand %p243, %p244
        %p246 = pneg %p245
        // Predicated region
        $region29: #{tpu_custom_call.1} parent=23 // pred_check
          _
        $region30: #{tpu_custom_call.1} parent=23 // pred_check_branch
          %248 = sbr.rel (%p245) target = $region32
        $region31: #{tpu_custom_call.1} parent=23 // pred_region
          %vm249 = vcmask 3072
          %250 = vst.msk [vmem:[%s1] sm:$0xf] %vm249, %v172
          %vm251 = vcmask 27648
          %252 = vst.msk [vmem:[#allocation5] sm:$0xf] %vm251, %v240
        $region32: #{tpu_custom_call.1} parent=23 // pred_fallthru
          _
        %p253 = pneg %p246
        // Predicated region
        $region33: #{tpu_custom_call.1} parent=23 // pred_check
          _
        $region34: #{tpu_custom_call.1} parent=23 // pred_check_branch
          %255 = sbr.rel (%p246) target = $region36
        $region35: #{tpu_custom_call.1} parent=23 // pred_region
          %v256 = vld [vmem:[%s1] sm:$0xf]
          %v257 = vadd.f32 %v256, %v172
          %vm258 = vcmask 3072
          %259 = vst.msk [vmem:[%s1] sm:$0xf] %vm258, %v257
          %v260 = vld [vmem:[#allocation5] sm:$0xf]
          %v261 = vadd.f32 %v260, %v240
          %vm262 = vcmask 27648
          %263 = vst.msk [vmem:[#allocation5] sm:$0xf] %vm262, %v261
        $region36: #{tpu_custom_call.1} parent=23 // pred_fallthru
          _
        // Predicated region
        $region37: #{tpu_custom_call.1} parent=23 // pred_check
          %p264 = pneg %p71
        $region38: #{tpu_custom_call.1} parent=23 // pred_check_branch
          %266 = sbr.rel (%p264) target = $region40
        $region39: #{tpu_custom_call.1} parent=23 // pred_region
          _
        $region40: #{tpu_custom_call.1} parent=23 // pred_fallthru
          _
        // Predicated region
        $region41: #{tpu_custom_call.1} parent=23 // pred_check
          %p267 = pneg %p92
        $region42: #{tpu_custom_call.1} parent=23 // pred_check_branch
          %269 = sbr.rel (%p267) target = $region44
        $region43: #{tpu_custom_call.1} parent=23 // pred_region
          %s271 = ssub.s32 64, 64
          %272 = vsyncadd [#allocation4], %s271
          %s274 = sshll.u32 [#allocation5], 4
          %s275 = int_to_ptr.vmem [resolvable:$true] %s274
          %277 = dma.vmem_to_hbm [thread:$0]  %s275, 64, %s2, [#allocation4]
        $region44: #{tpu_custom_call.1} parent=23 // pred_fallthru
          _
        // Predicated region
        $region45: #{tpu_custom_call.1} parent=23 // pred_check
          %p278 = pneg %p71
        $region46: #{tpu_custom_call.1} parent=23 // pred_check_branch
          %280 = sbr.rel (%p278) target = $region48
        $region47: #{tpu_custom_call.1} parent=23 // pred_region
          _
        $region48: #{tpu_custom_call.1} parent=23 // pred_fallthru
          _
        // Predicated region
        $region49: #{tpu_custom_call.1} parent=23 // pred_check
          %p281 = pneg %p92
        $region50: #{tpu_custom_call.1} parent=23 // pred_check_branch
          %283 = sbr.rel (%p281) target = $region52
        $region51: #{tpu_custom_call.1} parent=23 // pred_region
          %284 = dma.done [#allocation4], 64
        $region52: #{tpu_custom_call.1} parent=23 // pred_fallthru
          _
      $region24: #{tpu_custom_call.1} parent=5 // pred_fallthru
        _
      %p285 = scmp.le.s32.totalorder 2, %s13
      // Predicated region
      $region53: #{tpu_custom_call.1} parent=5 // pred_check
        %p286 = pneg %p285
      $region54: #{tpu_custom_call.1} parent=5 // pred_check_branch
        %288 = sbr.rel (%p286) target = $region56
      $region55: #{tpu_custom_call.1} parent=5 // pred_region
        %s289 = ssub.s32 %s13, 2
      $region56: #{tpu_custom_call.1} parent=5 // pred_fallthru
        _
    $region6: #{tpu_custom_call.1} parent=1 // loop_footer
      %s17 = sadd.s32 1, %s13
    $region7: #{tpu_custom_call.1} parent=1 // loop_footer_branch
      %12 = sbr.rel target = $region3
    $region8: #{tpu_custom_call.1} parent=1 // loop_exit
      _
    %290 = vsyncpa [#allocation3], 1
    %s291 = scalar_lea.sflag [#allocation3], 1
    %292 = vsyncpa %s291, 1
    %293 = vsyncpa [#allocation4], 1
    %s294 = scalar_lea.sflag [#allocation4], 1
    %295 = vsyncpa %s294, 1

</llo_original>
